<compile_context>
chip_gen: v5e
topology: v5e:2x2
jax: 0.10.0
libtpu: 0.0.40
codegen_flags: <defaults>
</compile_context>

<pallas_src>
import functools

import jax
import jax.numpy as jnp
from jax import lax
from jax.experimental import pallas as pl
from jax.experimental.pallas import tpu as pltpu


def _drdnn_kernel(x_ref, wih_ref, whh_ref, bg_ref,
                  w1_ref, b1_ref, w2_ref, b2_ref, w3_ref, b3_ref,
                  out_ref, *, hidden, seq_len):
    """Whole forward pass in one invocation (no grid)."""
    H = hidden
    T = seq_len

    # ---- Hoisted input projection: one (T, F) @ (F, 4H) matmul + bias ------
    xg = (jnp.dot(x_ref[...], wih_ref[...], preferred_element_type=jnp.float32)
          + bg_ref[...])                                   # (T, 4H)

    whh = whh_ref[...]                                     # (H, 4H)

    # ---- Unrolled LSTM recurrence over the single relevant batch row -------
    h = jnp.zeros((1, H), jnp.float32)
    c = jnp.zeros((1, H), jnp.float32)
    seq = jnp.zeros((T, H), jnp.float32)                   # out[:, -1, :] rows
    row_ids = lax.broadcasted_iota(jnp.int32, (T, H), 0)

    for t in range(T):                                     # T static & small
        gates = xg[t:t + 1, :] + jnp.dot(h, whh,
                                         preferred_element_type=jnp.float32)
        # Full-vreg transcendentals on the EUP, then static lane slices
        # (PyTorch gate order [i, f, g, o]).
        sig = jax.nn.sigmoid(gates)                        # (1, 4H)
        th = jnp.tanh(gates)                               # (1, 4H)
        i_g = sig[:, 0 * H:1 * H]
        f_g = sig[:, 1 * H:2 * H]
        g_g = th[:, 2 * H:3 * H]
        o_g = sig[:, 3 * H:4 * H]

        c = f_g * c + i_g * g_g
        h = o_g * jnp.tanh(c)

        # Accumulate row t of the (T, H) slab without masked partial stores.
        seq = jnp.where(row_ids == t, jnp.broadcast_to(h, (T, H)), seq)

    # ---- 3-layer MLP over the (T, H) slab ----------------------------------
    z = jnp.dot(seq, w1_ref[...], preferred_element_type=jnp.float32) + b1_ref[...]
    z = jnp.maximum(z, 0.0)                                # relu1
    z = jnp.dot(z, w2_ref[...], preferred_element_type=jnp.float32) + b2_ref[...]
    z = jnp.maximum(z, 0.0)                                # relu2
    z = jnp.dot(z, w3_ref[...], preferred_element_type=jnp.float32) + b3_ref[...]
    out_ref[...] = z.astype(out_ref.dtype)                 # (T, 128) lane-dense


def drdnn_pallas(x, params):
    """x: (T, B, 120) float32.  Returns (T, 120) float32."""
    W_ih, W_hh, b_ih, b_hh, W1, b1, W2, b2, W3, b3 = params
    T, B, F = x.shape
    H = W_hh.shape[1]                                      # (4H, H)
    OUT = W3.shape[0]                                      # 120
    OUT_PAD = ((OUT + 127) // 128) * 128                   # lane-dense output

    # Only the last batch element ever reaches out[:, -1, :]; LSTM batch rows
    # are independent, so slicing it here is exact and drops (B-1)/B of work.
    x_last = x[:, -1, :]                                   # (T, F)

    # Pre-transpose to (in, out), fold the two LSTM biases, zero-pad fc3.
    wih_t = W_ih.T                                         # (F, 4H)
    whh_t = W_hh.T                                         # (H, 4H)
    bg = (b_ih + b_hh).reshape(1, 4 * H)                   # (1, 4H)
    w1_t, w2_t = W1.T, W2.T                                # (H, H), (H, H)
    b1r, b2r = b1.reshape(1, -1), b2.reshape(1, -1)        # (1, H)
    w3_t = jnp.pad(W3.T, ((0, 0), (0, OUT_PAD - OUT)))     # (H, 128)
    b3r = jnp.pad(b3.reshape(1, -1), ((0, 0), (0, OUT_PAD - OUT)))  # (1, 128)

    kernel = functools.partial(_drdnn_kernel, hidden=H, seq_len=T)
    vmem = pl.BlockSpec(memory_space=pltpu.MemorySpace.VMEM)

    out = pl.pallas_call(
        kernel,
        out_shape=jax.ShapeDtypeStruct((T, OUT_PAD), jnp.float32),
        in_specs=[vmem] * 10,
        out_specs=vmem,
    )(x_last, wih_t, whh_t, bg, w1_t, b1r, w2_t, b2r, w3_t, b3r)

    return out[:, :OUT]


def drdnn_reference(x, params):
    """Pure-JAX reference mirroring the PyTorch forward exactly (full batch)."""
    W_ih, W_hh, b_ih, b_hh, W1, b1, W2, b2, W3, b3 = params
    T, B, F = x.shape
    H = W_hh.shape[1]

    def step(carry, x_t):
        h, c = carry
        gates = x_t @ W_ih.T + b_ih + h @ W_hh.T + b_hh
        i = jax.nn.sigmoid(gates[:, 0 * H:1 * H])
        f = jax.nn.sigmoid(gates[:, 1 * H:2 * H])
        g = jnp.tanh(gates[:, 2 * H:3 * H])
        o = jax.nn.sigmoid(gates[:, 3 * H:4 * H])
        c_new = f * c + i * g
        h_new = o * jnp.tanh(c_new)
        return (h_new, c_new), h_new

    init = (jnp.zeros((B, H), jnp.float32), jnp.zeros((B, H), jnp.float32))
    _, hs = lax.scan(step, init, x)        # (T, B, H)
    out = hs[:, -1, :]                     # (T, H)  -- last batch element
    z = jnp.maximum(out @ W1.T + b1, 0.0)
    z = jnp.maximum(z @ W2.T + b2, 0.0)
    return z @ W3.T + b3                   # (T, 120)


def make_params(key, hidden, in_features=120):
    """Deterministic synthetic parameters with PyTorch-like uniform init."""
    H = hidden
    bound = 1.0 / jnp.sqrt(jnp.float32(H))
    ks = jax.random.split(key, 10)
    u = lambda k, shape: jax.random.uniform(k, shape, jnp.float32, -bound, bound)
    W_ih = u(ks[0], (4 * H, in_features))
    W_hh = u(ks[1], (4 * H, H))
    b_ih = u(ks[2], (4 * H,))
    b_hh = u(ks[3], (4 * H,))
    W1 = u(ks[4], (H, H));   b1 = u(ks[5], (H,))
    W2 = u(ks[6], (H, H));   b2 = u(ks[7], (H,))
    W3 = u(ks[8], (in_features, H)); b3 = u(ks[9], (in_features,))
    return (W_ih, W_hh, b_ih, b_hh, W1, b1, W2, b2, W3, b3)


if __name__ == "__main__":
    T, B, F, H = 8, 4, 120, 32    # seq=8, batch=4, input=120, lstm_hidden_size=32

    key = jax.random.PRNGKey(0)
    kx, kp = jax.random.split(key)
    x = jax.random.normal(kx, (T, B, F), jnp.float32)
    params = make_params(kp, H, F)

    y = jax.block_until_ready(drdnn_pallas(x, params))
    y_ref = jax.block_until_ready(drdnn_reference(x, params))

    assert y.shape == (T, 120), y.shape
    assert jnp.allclose(y, y_ref, atol=1e-4, rtol=1e-4), \
        float(jnp.max(jnp.abs(y - y_ref)))

    print("KERNEL_OK")
</pallas_src>

<mosaic_0001>
module attributes {stable_mosaic.version = 11 : i64} {
  func.func @_drdnn_kernel(%arg0: memref<8x120xf32, #tpu.memory_space<vmem>>, %arg1: memref<120x128xf32, #tpu.memory_space<vmem>>, %arg2: memref<32x128xf32, #tpu.memory_space<vmem>>, %arg3: memref<1x128xf32, #tpu.memory_space<vmem>>, %arg4: memref<32x32xf32, #tpu.memory_space<vmem>>, %arg5: memref<1x32xf32, #tpu.memory_space<vmem>>, %arg6: memref<32x32xf32, #tpu.memory_space<vmem>>, %arg7: memref<1x32xf32, #tpu.memory_space<vmem>>, %arg8: memref<32x128xf32, #tpu.memory_space<vmem>>, %arg9: memref<1x128xf32, #tpu.memory_space<vmem>>, %arg10: memref<8x128xf32, #tpu.memory_space<vmem>>) attributes {dimension_semantics = [], scalar_prefetch = 0 : i64, scratch_operands = 0 : i64, tpu.core_type = #tpu.core_type<tc>} {
    %c0 = arith.constant 0 : index
    %c0_0 = arith.constant 0 : index
    %0 = vector.load %arg0[%c0, %c0_0] : memref<8x120xf32, #tpu.memory_space<vmem>>, vector<8x120xf32>
    %c0_1 = arith.constant 0 : index
    %c0_2 = arith.constant 0 : index
    %1 = vector.load %arg1[%c0_1, %c0_2] : memref<120x128xf32, #tpu.memory_space<vmem>>, vector<120x128xf32>
    %cst = arith.constant dense<0.000000e+00> : vector<8x128xf32>
    %2 = tpu.matmul %0, %1, %cst {dimension_numbers = #tpu.dot_dimension_numbers<[1], [0], [0], [1], [0, 0, 1, 1], [], []>} : vector<8x120xf32>, vector<120x128xf32>, vector<8x128xf32> -> vector<8x128xf32>
    %c0_3 = arith.constant 0 : index
    %c0_4 = arith.constant 0 : index
    %3 = vector.load %arg3[%c0_3, %c0_4] : memref<1x128xf32, #tpu.memory_space<vmem>>, vector<1x128xf32>
    %4 = vector.broadcast %3 : vector<1x128xf32> to vector<8x128xf32>
    %5 = arith.addf %2, %4 : vector<8x128xf32>
    %c0_5 = arith.constant 0 : index
    %c0_6 = arith.constant 0 : index
    %6 = vector.load %arg2[%c0_5, %c0_6] : memref<32x128xf32, #tpu.memory_space<vmem>>, vector<32x128xf32>
    %cst_7 = arith.constant 0.000000e+00 : f32
    %7 = vector.broadcast %cst_7 : f32 to vector<1x32xf32>
    %cst_8 = arith.constant 0.000000e+00 : f32
    %8 = vector.broadcast %cst_8 : f32 to vector<1x32xf32>
    %cst_9 = arith.constant 0.000000e+00 : f32
    %9 = vector.broadcast %cst_9 : f32 to vector<8x32xf32>
    %10 = tpu.iota {dimensions = array<i32: 0>} : vector<8x32xi32>
    %11 = vector.extract_strided_slice %5 {offsets = [0, 0], sizes = [1, 128], strides = [1, 1]} : vector<8x128xf32> to vector<1x128xf32>
    %cst_10 = arith.constant dense<0.000000e+00> : vector<1x128xf32>
    %12 = tpu.matmul %7, %6, %cst_10 {dimension_numbers = #tpu.dot_dimension_numbers<[1], [0], [0], [1], [0, 0, 1, 1], [], []>} : vector<1x32xf32>, vector<32x128xf32>, vector<1x128xf32> -> vector<1x128xf32>
    %13 = arith.addf %11, %12 : vector<1x128xf32>
    %14 = arith.negf %13 : vector<1x128xf32>
    %15 = math.exp %14 : vector<1x128xf32>
    %cst_11 = arith.constant 1.000000e+00 : f32
    %16 = vector.broadcast %cst_11 : f32 to vector<1x128xf32>
    %17 = arith.addf %16, %15 : vector<1x128xf32>
    %18 = arith.divf %16, %17 : vector<1x128xf32>
    %19 = math.tanh %13 : vector<1x128xf32>
    %20 = vector.extract_strided_slice %18 {offsets = [0, 0], sizes = [1, 32], strides = [1, 1]} : vector<1x128xf32> to vector<1x32xf32>
    %21 = vector.extract_strided_slice %18 {offsets = [0, 32], sizes = [1, 32], strides = [1, 1]} : vector<1x128xf32> to vector<1x32xf32>
    %22 = vector.extract_strided_slice %19 {offsets = [0, 64], sizes = [1, 32], strides = [1, 1]} : vector<1x128xf32> to vector<1x32xf32>
    %23 = vector.extract_strided_slice %18 {offsets = [0, 96], sizes = [1, 32], strides = [1, 1]} : vector<1x128xf32> to vector<1x32xf32>
    %24 = arith.mulf %21, %8 : vector<1x32xf32>
    %25 = arith.mulf %20, %22 : vector<1x32xf32>
    %26 = arith.addf %24, %25 : vector<1x32xf32>
    %27 = math.tanh %26 : vector<1x32xf32>
    %28 = arith.mulf %23, %27 : vector<1x32xf32>
    %c0_i32 = arith.constant 0 : i32
    %29 = vector.broadcast %c0_i32 : i32 to vector<8x32xi32>
    %30 = arith.cmpi eq, %10, %29 : vector<8x32xi32>
    %31 = vector.shape_cast %28 : vector<1x32xf32> to vector<1x32xf32>
    %32 = vector.broadcast %31 : vector<1x32xf32> to vector<8x32xf32>
    %33 = arith.select %30, %32, %9 : vector<8x32xi1>, vector<8x32xf32>
    %34 = vector.extract_strided_slice %5 {offsets = [1, 0], sizes = [1, 128], strides = [1, 1]} : vector<8x128xf32> to vector<1x128xf32>
    %cst_12 = arith.constant dense<0.000000e+00> : vector<1x128xf32>
    %35 = tpu.matmul %28, %6, %cst_12 {dimension_numbers = #tpu.dot_dimension_numbers<[1], [0], [0], [1], [0, 0, 1, 1], [], []>} : vector<1x32xf32>, vector<32x128xf32>, vector<1x128xf32> -> vector<1x128xf32>
    %36 = arith.addf %34, %35 : vector<1x128xf32>
    %37 = arith.negf %36 : vector<1x128xf32>
    %38 = math.exp %37 : vector<1x128xf32>
    %cst_13 = arith.constant 1.000000e+00 : f32
    %39 = vector.broadcast %cst_13 : f32 to vector<1x128xf32>
    %40 = arith.addf %39, %38 : vector<1x128xf32>
    %41 = arith.divf %39, %40 : vector<1x128xf32>
    %42 = math.tanh %36 : vector<1x128xf32>
    %43 = vector.extract_strided_slice %41 {offsets = [0, 0], sizes = [1, 32], strides = [1, 1]} : vector<1x128xf32> to vector<1x32xf32>
    %44 = vector.extract_strided_slice %41 {offsets = [0, 32], sizes = [1, 32], strides = [1, 1]} : vector<1x128xf32> to vector<1x32xf32>
    %45 = vector.extract_strided_slice %42 {offsets = [0, 64], sizes = [1, 32], strides = [1, 1]} : vector<1x128xf32> to vector<1x32xf32>
    %46 = vector.extract_strided_slice %41 {offsets = [0, 96], sizes = [1, 32], strides = [1, 1]} : vector<1x128xf32> to vector<1x32xf32>
    %47 = arith.mulf %44, %26 : vector<1x32xf32>
    %48 = arith.mulf %43, %45 : vector<1x32xf32>
    %49 = arith.addf %47, %48 : vector<1x32xf32>
    %50 = math.tanh %49 : vector<1x32xf32>
    %51 = arith.mulf %46, %50 : vector<1x32xf32>
    %c1_i32 = arith.constant 1 : i32
    %52 = vector.broadcast %c1_i32 : i32 to vector<8x32xi32>
    %53 = arith.cmpi eq, %10, %52 : vector<8x32xi32>
    %54 = vector.shape_cast %51 : vector<1x32xf32> to vector<1x32xf32>
    %55 = vector.broadcast %54 : vector<1x32xf32> to vector<8x32xf32>
    %56 = arith.select %53, %55, %33 : vector<8x32xi1>, vector<8x32xf32>
    %57 = vector.extract_strided_slice %5 {offsets = [2, 0], sizes = [1, 128], strides = [1, 1]} : vector<8x128xf32> to vector<1x128xf32>
    %cst_14 = arith.constant dense<0.000000e+00> : vector<1x128xf32>
    %58 = tpu.matmul %51, %6, %cst_14 {dimension_numbers = #tpu.dot_dimension_numbers<[1], [0], [0], [1], [0, 0, 1, 1], [], []>} : vector<1x32xf32>, vector<32x128xf32>, vector<1x128xf32> -> vector<1x128xf32>
    %59 = arith.addf %57, %58 : vector<1x128xf32>
    %60 = arith.negf %59 : vector<1x128xf32>
    %61 = math.exp %60 : vector<1x128xf32>
    %cst_15 = arith.constant 1.000000e+00 : f32
    %62 = vector.broadcast %cst_15 : f32 to vector<1x128xf32>
    %63 = arith.addf %62, %61 : vector<1x128xf32>
    %64 = arith.divf %62, %63 : vector<1x128xf32>
    %65 = math.tanh %59 : vector<1x128xf32>
    %66 = vector.extract_strided_slice %64 {offsets = [0, 0], sizes = [1, 32], strides = [1, 1]} : vector<1x128xf32> to vector<1x32xf32>
    %67 = vector.extract_strided_slice %64 {offsets = [0, 32], sizes = [1, 32], strides = [1, 1]} : vector<1x128xf32> to vector<1x32xf32>
    %68 = vector.extract_strided_slice %65 {offsets = [0, 64], sizes = [1, 32], strides = [1, 1]} : vector<1x128xf32> to vector<1x32xf32>
    %69 = vector.extract_strided_slice %64 {offsets = [0, 96], sizes = [1, 32], strides = [1, 1]} : vector<1x128xf32> to vector<1x32xf32>
    %70 = arith.mulf %67, %49 : vector<1x32xf32>
    %71 = arith.mulf %66, %68 : vector<1x32xf32>
    %72 = arith.addf %70, %71 : vector<1x32xf32>
    %73 = math.tanh %72 : vector<1x32xf32>
    %74 = arith.mulf %69, %73 : vector<1x32xf32>
    %c2_i32 = arith.constant 2 : i32
    %75 = vector.broadcast %c2_i32 : i32 to vector<8x32xi32>
    %76 = arith.cmpi eq, %10, %75 : vector<8x32xi32>
    %77 = vector.shape_cast %74 : vector<1x32xf32> to vector<1x32xf32>
    %78 = vector.broadcast %77 : vector<1x32xf32> to vector<8x32xf32>
    %79 = arith.select %76, %78, %56 : vector<8x32xi1>, vector<8x32xf32>
    %80 = vector.extract_strided_slice %5 {offsets = [3, 0], sizes = [1, 128], strides = [1, 1]} : vector<8x128xf32> to vector<1x128xf32>
    %cst_16 = arith.constant dense<0.000000e+00> : vector<1x128xf32>
    %81 = tpu.matmul %74, %6, %cst_16 {dimension_numbers = #tpu.dot_dimension_numbers<[1], [0], [0], [1], [0, 0, 1, 1], [], []>} : vector<1x32xf32>, vector<32x128xf32>, vector<1x128xf32> -> vector<1x128xf32>
    %82 = arith.addf %80, %81 : vector<1x128xf32>
    %83 = arith.negf %82 : vector<1x128xf32>
    %84 = math.exp %83 : vector<1x128xf32>
    %cst_17 = arith.constant 1.000000e+00 : f32
    %85 = vector.broadcast %cst_17 : f32 to vector<1x128xf32>
    %86 = arith.addf %85, %84 : vector<1x128xf32>
    %87 = arith.divf %85, %86 : vector<1x128xf32>
    %88 = math.tanh %82 : vector<1x128xf32>
    %89 = vector.extract_strided_slice %87 {offsets = [0, 0], sizes = [1, 32], strides = [1, 1]} : vector<1x128xf32> to vector<1x32xf32>
    %90 = vector.extract_strided_slice %87 {offsets = [0, 32], sizes = [1, 32], strides = [1, 1]} : vector<1x128xf32> to vector<1x32xf32>
    %91 = vector.extract_strided_slice %88 {offsets = [0, 64], sizes = [1, 32], strides = [1, 1]} : vector<1x128xf32> to vector<1x32xf32>
    %92 = vector.extract_strided_slice %87 {offsets = [0, 96], sizes = [1, 32], strides = [1, 1]} : vector<1x128xf32> to vector<1x32xf32>
    %93 = arith.mulf %90, %72 : vector<1x32xf32>
    %94 = arith.mulf %89, %91 : vector<1x32xf32>
    %95 = arith.addf %93, %94 : vector<1x32xf32>
    %96 = math.tanh %95 : vector<1x32xf32>
    %97 = arith.mulf %92, %96 : vector<1x32xf32>
    %c3_i32 = arith.constant 3 : i32
    %98 = vector.broadcast %c3_i32 : i32 to vector<8x32xi32>
    %99 = arith.cmpi eq, %10, %98 : vector<8x32xi32>
    %100 = vector.shape_cast %97 : vector<1x32xf32> to vector<1x32xf32>
    %101 = vector.broadcast %100 : vector<1x32xf32> to vector<8x32xf32>
    %102 = arith.select %99, %101, %79 : vector<8x32xi1>, vector<8x32xf32>
    %103 = vector.extract_strided_slice %5 {offsets = [4, 0], sizes = [1, 128], strides = [1, 1]} : vector<8x128xf32> to vector<1x128xf32>
    %cst_18 = arith.constant dense<0.000000e+00> : vector<1x128xf32>
    %104 = tpu.matmul %97, %6, %cst_18 {dimension_numbers = #tpu.dot_dimension_numbers<[1], [0], [0], [1], [0, 0, 1, 1], [], []>} : vector<1x32xf32>, vector<32x128xf32>, vector<1x128xf32> -> vector<1x128xf32>
    %105 = arith.addf %103, %104 : vector<1x128xf32>
    %106 = arith.negf %105 : vector<1x128xf32>
    %107 = math.exp %106 : vector<1x128xf32>
    %cst_19 = arith.constant 1.000000e+00 : f32
    %108 = vector.broadcast %cst_19 : f32 to vector<1x128xf32>
    %109 = arith.addf %108, %107 : vector<1x128xf32>
    %110 = arith.divf %108, %109 : vector<1x128xf32>
    %111 = math.tanh %105 : vector<1x128xf32>
    %112 = vector.extract_strided_slice %110 {offsets = [0, 0], sizes = [1, 32], strides = [1, 1]} : vector<1x128xf32> to vector<1x32xf32>
    %113 = vector.extract_strided_slice %110 {offsets = [0, 32], sizes = [1, 32], strides = [1, 1]} : vector<1x128xf32> to vector<1x32xf32>
    %114 = vector.extract_strided_slice %111 {offsets = [0, 64], sizes = [1, 32], strides = [1, 1]} : vector<1x128xf32> to vector<1x32xf32>
    %115 = vector.extract_strided_slice %110 {offsets = [0, 96], sizes = [1, 32], strides = [1, 1]} : vector<1x128xf32> to vector<1x32xf32>
    %116 = arith.mulf %113, %95 : vector<1x32xf32>
    %117 = arith.mulf %112, %114 : vector<1x32xf32>
    %118 = arith.addf %116, %117 : vector<1x32xf32>
    %119 = math.tanh %118 : vector<1x32xf32>
    %120 = arith.mulf %115, %119 : vector<1x32xf32>
    %c4_i32 = arith.constant 4 : i32
    %121 = vector.broadcast %c4_i32 : i32 to vector<8x32xi32>
    %122 = arith.cmpi eq, %10, %121 : vector<8x32xi32>
    %123 = vector.shape_cast %120 : vector<1x32xf32> to vector<1x32xf32>
    %124 = vector.broadcast %123 : vector<1x32xf32> to vector<8x32xf32>
    %125 = arith.select %122, %124, %102 : vector<8x32xi1>, vector<8x32xf32>
    %126 = vector.extract_strided_slice %5 {offsets = [5, 0], sizes = [1, 128], strides = [1, 1]} : vector<8x128xf32> to vector<1x128xf32>
    %cst_20 = arith.constant dense<0.000000e+00> : vector<1x128xf32>
    %127 = tpu.matmul %120, %6, %cst_20 {dimension_numbers = #tpu.dot_dimension_numbers<[1], [0], [0], [1], [0, 0, 1, 1], [], []>} : vector<1x32xf32>, vector<32x128xf32>, vector<1x128xf32> -> vector<1x128xf32>
    %128 = arith.addf %126, %127 : vector<1x128xf32>
    %129 = arith.negf %128 : vector<1x128xf32>
    %130 = math.exp %129 : vector<1x128xf32>
    %cst_21 = arith.constant 1.000000e+00 : f32
    %131 = vector.broadcast %cst_21 : f32 to vector<1x128xf32>
    %132 = arith.addf %131, %130 : vector<1x128xf32>
    %133 = arith.divf %131, %132 : vector<1x128xf32>
    %134 = math.tanh %128 : vector<1x128xf32>
    %135 = vector.extract_strided_slice %133 {offsets = [0, 0], sizes = [1, 32], strides = [1, 1]} : vector<1x128xf32> to vector<1x32xf32>
    %136 = vector.extract_strided_slice %133 {offsets = [0, 32], sizes = [1, 32], strides = [1, 1]} : vector<1x128xf32> to vector<1x32xf32>
    %137 = vector.extract_strided_slice %134 {offsets = [0, 64], sizes = [1, 32], strides = [1, 1]} : vector<1x128xf32> to vector<1x32xf32>
    %138 = vector.extract_strided_slice %133 {offsets = [0, 96], sizes = [1, 32], strides = [1, 1]} : vector<1x128xf32> to vector<1x32xf32>
    %139 = arith.mulf %136, %118 : vector<1x32xf32>
    %140 = arith.mulf %135, %137 : vector<1x32xf32>
    %141 = arith.addf %139, %140 : vector<1x32xf32>
    %142 = math.tanh %141 : vector<1x32xf32>
    %143 = arith.mulf %138, %142 : vector<1x32xf32>
    %c5_i32 = arith.constant 5 : i32
    %144 = vector.broadcast %c5_i32 : i32 to vector<8x32xi32>
    %145 = arith.cmpi eq, %10, %144 : vector<8x32xi32>
    %146 = vector.shape_cast %143 : vector<1x32xf32> to vector<1x32xf32>
    %147 = vector.broadcast %146 : vector<1x32xf32> to vector<8x32xf32>
    %148 = arith.select %145, %147, %125 : vector<8x32xi1>, vector<8x32xf32>
    %149 = vector.extract_strided_slice %5 {offsets = [6, 0], sizes = [1, 128], strides = [1, 1]} : vector<8x128xf32> to vector<1x128xf32>
    %cst_22 = arith.constant dense<0.000000e+00> : vector<1x128xf32>
    %150 = tpu.matmul %143, %6, %cst_22 {dimension_numbers = #tpu.dot_dimension_numbers<[1], [0], [0], [1], [0, 0, 1, 1], [], []>} : vector<1x32xf32>, vector<32x128xf32>, vector<1x128xf32> -> vector<1x128xf32>
    %151 = arith.addf %149, %150 : vector<1x128xf32>
    %152 = arith.negf %151 : vector<1x128xf32>
    %153 = math.exp %152 : vector<1x128xf32>
    %cst_23 = arith.constant 1.000000e+00 : f32
    %154 = vector.broadcast %cst_23 : f32 to vector<1x128xf32>
    %155 = arith.addf %154, %153 : vector<1x128xf32>
    %156 = arith.divf %154, %155 : vector<1x128xf32>
    %157 = math.tanh %151 : vector<1x128xf32>
    %158 = vector.extract_strided_slice %156 {offsets = [0, 0], sizes = [1, 32], strides = [1, 1]} : vector<1x128xf32> to vector<1x32xf32>
    %159 = vector.extract_strided_slice %156 {offsets = [0, 32], sizes = [1, 32], strides = [1, 1]} : vector<1x128xf32> to vector<1x32xf32>
    %160 = vector.extract_strided_slice %157 {offsets = [0, 64], sizes = [1, 32], strides = [1, 1]} : vector<1x128xf32> to vector<1x32xf32>
    %161 = vector.extract_strided_slice %156 {offsets = [0, 96], sizes = [1, 32], strides = [1, 1]} : vector<1x128xf32> to vector<1x32xf32>
    %162 = arith.mulf %159, %141 : vector<1x32xf32>
    %163 = arith.mulf %158, %160 : vector<1x32xf32>
    %164 = arith.addf %162, %163 : vector<1x32xf32>
    %165 = math.tanh %164 : vector<1x32xf32>
    %166 = arith.mulf %161, %165 : vector<1x32xf32>
    %c6_i32 = arith.constant 6 : i32
    %167 = vector.broadcast %c6_i32 : i32 to vector<8x32xi32>
    %168 = arith.cmpi eq, %10, %167 : vector<8x32xi32>
    %169 = vector.shape_cast %166 : vector<1x32xf32> to vector<1x32xf32>
    %170 = vector.broadcast %169 : vector<1x32xf32> to vector<8x32xf32>
    %171 = arith.select %168, %170, %148 : vector<8x32xi1>, vector<8x32xf32>
    %172 = vector.extract_strided_slice %5 {offsets = [7, 0], sizes = [1, 128], strides = [1, 1]} : vector<8x128xf32> to vector<1x128xf32>
    %cst_24 = arith.constant dense<0.000000e+00> : vector<1x128xf32>
    %173 = tpu.matmul %166, %6, %cst_24 {dimension_numbers = #tpu.dot_dimension_numbers<[1], [0], [0], [1], [0, 0, 1, 1], [], []>} : vector<1x32xf32>, vector<32x128xf32>, vector<1x128xf32> -> vector<1x128xf32>
    %174 = arith.addf %172, %173 : vector<1x128xf32>
    %175 = arith.negf %174 : vector<1x128xf32>
    %176 = math.exp %175 : vector<1x128xf32>
    %cst_25 = arith.constant 1.000000e+00 : f32
    %177 = vector.broadcast %cst_25 : f32 to vector<1x128xf32>
    %178 = arith.addf %177, %176 : vector<1x128xf32>
    %179 = arith.divf %177, %178 : vector<1x128xf32>
    %180 = math.tanh %174 : vector<1x128xf32>
    %181 = vector.extract_strided_slice %179 {offsets = [0, 0], sizes = [1, 32], strides = [1, 1]} : vector<1x128xf32> to vector<1x32xf32>
    %182 = vector.extract_strided_slice %179 {offsets = [0, 32], sizes = [1, 32], strides = [1, 1]} : vector<1x128xf32> to vector<1x32xf32>
    %183 = vector.extract_strided_slice %180 {offsets = [0, 64], sizes = [1, 32], strides = [1, 1]} : vector<1x128xf32> to vector<1x32xf32>
    %184 = vector.extract_strided_slice %179 {offsets = [0, 96], sizes = [1, 32], strides = [1, 1]} : vector<1x128xf32> to vector<1x32xf32>
    %185 = arith.mulf %182, %164 : vector<1x32xf32>
    %186 = arith.mulf %181, %183 : vector<1x32xf32>
    %187 = arith.addf %185, %186 : vector<1x32xf32>
    %188 = math.tanh %187 : vector<1x32xf32>
    %189 = arith.mulf %184, %188 : vector<1x32xf32>
    %c7_i32 = arith.constant 7 : i32
    %190 = vector.broadcast %c7_i32 : i32 to vector<8x32xi32>
    %191 = arith.cmpi eq, %10, %190 : vector<8x32xi32>
    %192 = vector.shape_cast %189 : vector<1x32xf32> to vector<1x32xf32>
    %193 = vector.broadcast %192 : vector<1x32xf32> to vector<8x32xf32>
    %194 = arith.select %191, %193, %171 : vector<8x32xi1>, vector<8x32xf32>
    %c0_26 = arith.constant 0 : index
    %c0_27 = arith.constant 0 : index
    %195 = vector.load %arg4[%c0_26, %c0_27] : memref<32x32xf32, #tpu.memory_space<vmem>>, vector<32x32xf32>
    %cst_28 = arith.constant dense<0.000000e+00> : vector<8x32xf32>
    %196 = tpu.matmul %194, %195, %cst_28 {dimension_numbers = #tpu.dot_dimension_numbers<[1], [0], [0], [1], [0, 0, 1, 1], [], []>} : vector<8x32xf32>, vector<32x32xf32>, vector<8x32xf32> -> vector<8x32xf32>
    %c0_29 = arith.constant 0 : index
    %c0_30 = arith.constant 0 : index
    %197 = vector.load %arg5[%c0_29, %c0_30] : memref<1x32xf32, #tpu.memory_space<vmem>>, vector<1x32xf32>
    %198 = vector.broadcast %197 : vector<1x32xf32> to vector<8x32xf32>
    %199 = arith.addf %196, %198 : vector<8x32xf32>
    %cst_31 = arith.constant 0.000000e+00 : f32
    %200 = vector.broadcast %cst_31 : f32 to vector<8x32xf32>
    %201 = arith.maximumf %199, %200 : vector<8x32xf32>
    %c0_32 = arith.constant 0 : index
    %c0_33 = arith.constant 0 : index
    %202 = vector.load %arg6[%c0_32, %c0_33] : memref<32x32xf32, #tpu.memory_space<vmem>>, vector<32x32xf32>
    %cst_34 = arith.constant dense<0.000000e+00> : vector<8x32xf32>
    %203 = tpu.matmul %201, %202, %cst_34 {dimension_numbers = #tpu.dot_dimension_numbers<[1], [0], [0], [1], [0, 0, 1, 1], [], []>} : vector<8x32xf32>, vector<32x32xf32>, vector<8x32xf32> -> vector<8x32xf32>
    %c0_35 = arith.constant 0 : index
    %c0_36 = arith.constant 0 : index
    %204 = vector.load %arg7[%c0_35, %c0_36] : memref<1x32xf32, #tpu.memory_space<vmem>>, vector<1x32xf32>
    %205 = vector.broadcast %204 : vector<1x32xf32> to vector<8x32xf32>
    %206 = arith.addf %203, %205 : vector<8x32xf32>
    %cst_37 = arith.constant 0.000000e+00 : f32
    %207 = vector.broadcast %cst_37 : f32 to vector<8x32xf32>
    %208 = arith.maximumf %206, %207 : vector<8x32xf32>
    %c0_38 = arith.constant 0 : index
    %c0_39 = arith.constant 0 : index
    %209 = vector.load %arg8[%c0_38, %c0_39] : memref<32x128xf32, #tpu.memory_space<vmem>>, vector<32x128xf32>
    %cst_40 = arith.constant dense<0.000000e+00> : vector<8x128xf32>
    %210 = tpu.matmul %208, %209, %cst_40 {dimension_numbers = #tpu.dot_dimension_numbers<[1], [0], [0], [1], [0, 0, 1, 1], [], []>} : vector<8x32xf32>, vector<32x128xf32>, vector<8x128xf32> -> vector<8x128xf32>
    %c0_41 = arith.constant 0 : index
    %c0_42 = arith.constant 0 : index
    %211 = vector.load %arg9[%c0_41, %c0_42] : memref<1x128xf32, #tpu.memory_space<vmem>>, vector<1x128xf32>
    %212 = vector.broadcast %211 : vector<1x128xf32> to vector<8x128xf32>
    %213 = arith.addf %210, %212 : vector<8x128xf32>
    %c0_43 = arith.constant 0 : index
    %c0_44 = arith.constant 0 : index
    %214 = vector.load %arg10[%c0_43, %c0_44] : memref<8x128xf32, #tpu.memory_space<vmem>>, vector<8x128xf32>
    tpu.vector_store %arg10[%c0_43, %c0_44], %213 {strides = array<i32>} : memref<8x128xf32, #tpu.memory_space<vmem>>, vector<8x128xf32>,
    return
  }
}

</mosaic_0001>

<llo_original>
// kernel: tpu_custom_call.1
$region0: #{tpu_custom_call.1}
  #allocation0 [shape = 'u32[]', space=smem, size = 0x4, offset = 0x4, fixed_abs, tag = 'smem constant byte address 0x4 - core index']
  #allocation1 [shape = 'u32[72,128]{1,0:T(1,128)}', space=vmem, size = 0x9000, scoped, tag = 'internal scratch']
  %s0 = inlined_call_operand.hbm [shape: f32[8,120], index: 0, kind: input, shape index: {}]
  %s1 = inlined_call_operand.hbm [shape: f32[120,128], index: 1, kind: input, shape index: {}]
  %s2 = inlined_call_operand.hbm [shape: f32[32,128], index: 2, kind: input, shape index: {}]
  %s3 = inlined_call_operand.vmem [shape: f32[1,128], index: 3, kind: input, shape index: {}]
  %s4 = inlined_call_operand.hbm [shape: f32[32,32], index: 4, kind: input, shape index: {}]
  %s5 = inlined_call_operand.vmem [shape: f32[1,32], index: 5, kind: input, shape index: {}]
  %s6 = inlined_call_operand.hbm [shape: f32[32,32], index: 6, kind: input, shape index: {}]
  %s7 = inlined_call_operand.vmem [shape: f32[1,32], index: 7, kind: input, shape index: {}]
  %s8 = inlined_call_operand.hbm [shape: f32[32,128], index: 8, kind: input, shape index: {}]
  %s9 = inlined_call_operand.vmem [shape: f32[1,128], index: 9, kind: input, shape index: {}]
  %s10 = inlined_call_operand.hbm [shape: f32[8,128], index: 10, kind: output, shape index: {}]
  %s11 = sld [smem:[#allocation0]]
  $region74: #{tpu_custom_call.1} parent=0
    _
  %s13 = ssub.s32 1, %s11
  %s14 = scalar_select 0, %s13, %s11
  $region1: #{tpu_custom_call.1} parent=0
    #allocation2 [shape = 'u8[4096]{0}', space=vmem, size = 0x1000, scoped, tag = 'input window, operand 0, single buffered']
    #allocation3 [shape = 's32[1]{0}', space=sflag, size = 0x4, scoped, tag = 'scoped memory for tpu_custom_call.1']
    #allocation4 [shape = 's32[1]{0}', space=sflag, size = 0x4, scoped, tag = 'scoped memory for tpu_custom_call.1']
    #allocation5 [shape = 'u8[61440]{0}', space=vmem, size = 0xf000, scoped, tag = 'input window, operand 1, single buffered']
    #allocation6 [shape = 's32[1]{0}', space=sflag, size = 0x4, scoped, tag = 'scoped memory for tpu_custom_call.1']
    #allocation7 [shape = 'u8[16384]{0}', space=vmem, size = 0x4000, scoped, tag = 'input window, operand 2, single buffered']
    #allocation8 [shape = 'u8[16384]{0}', space=vmem, size = 0x4000, scoped, tag = 'input window, operand 4, single buffered']
    #allocation9 [shape = 's32[1]{0}', space=sflag, size = 0x4, scoped, tag = 'scoped memory for tpu_custom_call.1']
    #allocation10 [shape = 'u8[16384]{0}', space=vmem, size = 0x4000, scoped, tag = 'input window, operand 6, single buffered']
    #allocation11 [shape = 'u8[16384]{0}', space=vmem, size = 0x4000, scoped, tag = 'input window, operand 8, single buffered']
    #allocation12 [shape = 's32[1]{0}', space=sflag, size = 0x4, scoped, tag = 'scoped memory for tpu_custom_call.1']
    #allocation13 [shape = 'u8[4096]{0}', space=vmem, size = 0x1000, scoped, tag = 'output window, operand 0, single buffered']
    %15 = vsyncpa [#allocation3], 0
    %16 = vsyncpa [#allocation6], 0
    %17 = vsyncpa [#allocation9], 0
    %18 = vsyncpa [#allocation12], 0
    %19 = vsyncpa [#allocation4], 0
    // Predicated region
    $region2: #{tpu_custom_call.1} parent=1 // pred_check
      _
    $region3: #{tpu_custom_call.1} parent=1 // pred_check_branch
      %21 = sbr.rel (0) target = $region5
    $region4: #{tpu_custom_call.1} parent=1 // pred_region
      %23 = vsyncadd [#allocation3], 0
      %s25 = sshll.u32 %s0, 4
      %s26 = int_to_ptr.hbm [resolvable:$true] %s25
      %s27 = sshll.u32 [#allocation2], 4
      %s28 = int_to_ptr.vmem [resolvable:$true] %s27
      %30 = dma.hbm_to_vmem [thread:$0]  %s26, 128, %s28, [#allocation3]
    $region5: #{tpu_custom_call.1} parent=1 // pred_fallthru
      _
    // Predicated region
    $region6: #{tpu_custom_call.1} parent=1 // pred_check
      _
    $region7: #{tpu_custom_call.1} parent=1 // pred_check_branch
      %32 = sbr.rel (0) target = $region9
    $region8: #{tpu_custom_call.1} parent=1 // pred_region
      %34 = vsyncadd [#allocation6], 0
      %s35 = sshll.u32 %s1, 4
      %s36 = int_to_ptr.hbm [resolvable:$true] %s35
      %s37 = sshll.u32 [#allocation5], 4
      %s38 = int_to_ptr.vmem [resolvable:$true] %s37
      %43 = dma.hbm_to_vmem [thread:$0]  %s36, 1920, %s38, [#allocation6], 128, 128, 8
    $region9: #{tpu_custom_call.1} parent=1 // pred_fallthru
      _
    // Predicated region
    $region10: #{tpu_custom_call.1} parent=1 // pred_check
      _
    $region11: #{tpu_custom_call.1} parent=1 // pred_check_branch
      %45 = sbr.rel (0) target = $region13
    $region12: #{tpu_custom_call.1} parent=1 // pred_region
      %47 = vsyncadd [#allocation6], 0
      %s48 = sshll.u32 %s2, 4
      %s49 = int_to_ptr.hbm [resolvable:$true] %s48
      %s50 = sshll.u32 [#allocation7], 4
      %s51 = int_to_ptr.vmem [resolvable:$true] %s50
      %56 = dma.hbm_to_vmem [thread:$0]  %s49, 512, %s51, [#allocation6], 128, 128, 8
    $region13: #{tpu_custom_call.1} parent=1 // pred_fallthru
      _
    // Predicated region
    $region14: #{tpu_custom_call.1} parent=1 // pred_check
      _
    $region15: #{tpu_custom_call.1} parent=1 // pred_check_branch
      %58 = sbr.rel (0) target = $region17
    $region16: #{tpu_custom_call.1} parent=1 // pred_region
      _
    $region17: #{tpu_custom_call.1} parent=1 // pred_fallthru
      _
    // Predicated region
    $region18: #{tpu_custom_call.1} parent=1 // pred_check
      _
    $region19: #{tpu_custom_call.1} parent=1 // pred_check_branch
      %60 = sbr.rel (0) target = $region21
    $region20: #{tpu_custom_call.1} parent=1 // pred_region
      %62 = vsyncadd [#allocation9], 0
      %s63 = sshll.u32 %s4, 4
      %s64 = int_to_ptr.hbm [resolvable:$true] %s63
      %s65 = sshll.u32 [#allocation8], 4
      %s66 = int_to_ptr.vmem [resolvable:$true] %s65
      %71 = dma.hbm_to_vmem [thread:$0]  %s64, 512, %s66, [#allocation9], 128, 128, 8
    $region21: #{tpu_custom_call.1} parent=1 // pred_fallthru
      _
    // Predicated region
    $region22: #{tpu_custom_call.1} parent=1 // pred_check
      _
    $region23: #{tpu_custom_call.1} parent=1 // pred_check_branch
      %73 = sbr.rel (0) target = $region25
    $region24: #{tpu_custom_call.1} parent=1 // pred_region
      _
    $region25: #{tpu_custom_call.1} parent=1 // pred_fallthru
      _
    // Predicated region
    $region26: #{tpu_custom_call.1} parent=1 // pred_check
      _
    $region27: #{tpu_custom_call.1} parent=1 // pred_check_branch
      %75 = sbr.rel (0) target = $region29
    $region28: #{tpu_custom_call.1} parent=1 // pred_region
      %77 = vsyncadd [#allocation9], 0
      %s78 = sshll.u32 %s6, 4
      %s79 = int_to_ptr.hbm [resolvable:$true] %s78
      %s80 = sshll.u32 [#allocation10], 4
      %s81 = int_to_ptr.vmem [resolvable:$true] %s80
      %86 = dma.hbm_to_vmem [thread:$0]  %s79, 512, %s81, [#allocation9], 128, 128, 8
    $region29: #{tpu_custom_call.1} parent=1 // pred_fallthru
      _
    // Predicated region
    $region30: #{tpu_custom_call.1} parent=1 // pred_check
      _
    $region31: #{tpu_custom_call.1} parent=1 // pred_check_branch
      %88 = sbr.rel (0) target = $region33
    $region32: #{tpu_custom_call.1} parent=1 // pred_region
      _
    $region33: #{tpu_custom_call.1} parent=1 // pred_fallthru
      _
    // Predicated region
    $region34: #{tpu_custom_call.1} parent=1 // pred_check
      _
    $region35: #{tpu_custom_call.1} parent=1 // pred_check_branch
      %90 = sbr.rel (0) target = $region37
    $region36: #{tpu_custom_call.1} parent=1 // pred_region
      %92 = vsyncadd [#allocation12], 0
      %s93 = sshll.u32 %s8, 4
      %s94 = int_to_ptr.hbm [resolvable:$true] %s93
      %s95 = sshll.u32 [#allocation11], 4
      %s96 = int_to_ptr.vmem [resolvable:$true] %s95
      %101 = dma.hbm_to_vmem [thread:$0]  %s94, 512, %s96, [#allocation12], 128, 128, 8
    $region37: #{tpu_custom_call.1} parent=1 // pred_fallthru
      _
    // Predicated region
    $region38: #{tpu_custom_call.1} parent=1 // pred_check
      _
    $region39: #{tpu_custom_call.1} parent=1 // pred_check_branch
      %103 = sbr.rel (0) target = $region41
    $region40: #{tpu_custom_call.1} parent=1 // pred_region
      _
    $region41: #{tpu_custom_call.1} parent=1 // pred_fallthru
      _
    // Predicated region
    $region42: #{tpu_custom_call.1} parent=1 // pred_check
      _
    $region43: #{tpu_custom_call.1} parent=1 // pred_check_branch
      %105 = sbr.rel (0) target = $region45
    $region44: #{tpu_custom_call.1} parent=1 // pred_region
      %107 = dma.done [#allocation3], 128
    $region45: #{tpu_custom_call.1} parent=1 // pred_fallthru
      _
    // Predicated region
    $region46: #{tpu_custom_call.1} parent=1 // pred_check
      _
    $region47: #{tpu_custom_call.1} parent=1 // pred_check_branch
      %109 = sbr.rel (0) target = $region49
    $region48: #{tpu_custom_call.1} parent=1 // pred_region
      %111 = dma.done [#allocation6], 1920
    $region49: #{tpu_custom_call.1} parent=1 // pred_fallthru
      _
    // Predicated region
    $region50: #{tpu_custom_call.1} parent=1 // pred_check
      _
    $region51: #{tpu_custom_call.1} parent=1 // pred_check_branch
      %113 = sbr.rel (0) target = $region53
    $region52: #{tpu_custom_call.1} parent=1 // pred_region
      %115 = dma.done [#allocation6], 512
    $region53: #{tpu_custom_call.1} parent=1 // pred_fallthru
      _
    // Predicated region
    $region54: #{tpu_custom_call.1} parent=1 // pred_check
      _
    $region55: #{tpu_custom_call.1} parent=1 // pred_check_branch
      %117 = sbr.rel (0) target = $region57
    $region56: #{tpu_custom_call.1} parent=1 // pred_region
      %119 = dma.done [#allocation9], 512
    $region57: #{tpu_custom_call.1} parent=1 // pred_fallthru
      _
    // Predicated region
    $region58: #{tpu_custom_call.1} parent=1 // pred_check
      _
    $region59: #{tpu_custom_call.1} parent=1 // pred_check_branch
      %121 = sbr.rel (0) target = $region61
    $region60: #{tpu_custom_call.1} parent=1 // pred_region
      %123 = dma.done [#allocation9], 512
    $region61: #{tpu_custom_call.1} parent=1 // pred_fallthru
      _
    // Predicated region
    $region62: #{tpu_custom_call.1} parent=1 // pred_check
      _
    $region63: #{tpu_custom_call.1} parent=1 // pred_check_branch
      %125 = sbr.rel (0) target = $region65
    $region64: #{tpu_custom_call.1} parent=1 // pred_region
      %127 = dma.done [#allocation12], 512
    $region65: #{tpu_custom_call.1} parent=1 // pred_fallthru
      _
    %v128 = vld [vmem:[#allocation2] sm:$0xff]
    %v129 = vld [vmem:[#allocation5] sm:$0xff]
    %v130 = vld [vmem:[#allocation5 + $0x8] sm:$0xff]
    %v131 = vld [vmem:[#allocation5 + $0x10] sm:$0xff]
    %v132 = vld [vmem:[#allocation5 + $0x18] sm:$0xff]
    %v133 = vld [vmem:[#allocation5 + $0x20] sm:$0xff]
    %v134 = vld [vmem:[#allocation5 + $0x28] sm:$0xff]
    %v135 = vld [vmem:[#allocation5 + $0x30] sm:$0xff]
    %v136 = vld [vmem:[#allocation5 + $0x38] sm:$0xff]
    %v137 = vld [vmem:[#allocation5 + $0x40] sm:$0xff]
    %v138 = vld [vmem:[#allocation5 + $0x48] sm:$0xff]
    %v139 = vld [vmem:[#allocation5 + $0x50] sm:$0xff]
    %v140 = vld [vmem:[#allocation5 + $0x58] sm:$0xff]
    %v141 = vld [vmem:[#allocation5 + $0x60] sm:$0xff]
    %v142 = vld [vmem:[#allocation5 + $0x68] sm:$0xff]
    %v143 = vld [vmem:[#allocation5 + $0x70] sm:$0xff]
    %v144 = vld [vmem:[%s3] sm:$0x1]
    %v146 = vperm.slane %v144, 0
    %vm148 = vcmask 982016
    %v150 = vsel %vm148, %v128, 0
    %152 = vmatpush.msra.mxu0 0.0
    %153 = vmatpush.msra.mxu0 %v143
    %154 = vmatpush.msra.mxu0 %v142
    %155 = vmatpush.msra.mxu0 %v141
    %156 = vmatpush.msra.mxu0 %v140
    %157 = vmatpush.msra.mxu0 %v139
    %158 = vmatpush.msra.mxu0 %v138
    %159 = vmatpush.msra.mxu0 %v137
    %160 = vmatpush.msra.mxu0 %v136
    %161 = vmatpush.msra.mxu0 %v135
    %162 = vmatpush.msra.mxu0 %v134
    %163 = vmatpush.msra.mxu0 %v133
    %164 = vmatpush.msra.mxu0 %v132
    %165 = vmatpush.msra.mxu0 %v131
    %166 = vmatpush.msra.mxu0 %v130
    %167 = vmatpush.msra.mxu0 %v129
    %168 = vmatmul.f32.gmra.mxu0 %v150
    %v169 = vpop.f32.mrf.mxu0
    %v170 = vadd.f32 %v146, %v169
    %171 = vdwg.mxu0
    %v172 = vld [vmem:[#allocation7] sm:$0xff]
    %v173 = vld [vmem:[#allocation7 + $0x8] sm:$0xff]
    %v174 = vld [vmem:[#allocation7 + $0x10] sm:$0xff]
    %v175 = vld [vmem:[#allocation7 + $0x18] sm:$0xff]
    %v176 = vlaneseq
    %v177 = vshrl.u32 %v176, 7
    %vm178 = vcmask 261120
    %v180 = vsel %vm178, 0.0, 0
    %182 = vmatpush.msra.mxu0 0.0
    %183 = vmatpush.msra.mxu0 0.0
    %184 = vmatpush.msra.mxu0 0.0
    %185 = vmatpush.msra.mxu0 0.0
    %186 = vmatpush.msra.mxu0 0.0
    %187 = vmatpush.msra.mxu0 0.0
    %188 = vmatpush.msra.mxu0 0.0
    %189 = vmatpush.msra.mxu0 0.0
    %190 = vmatpush.msra.mxu0 0.0
    %191 = vmatpush.msra.mxu0 0.0
    %192 = vmatpush.msra.mxu0 0.0
    %193 = vmatpush.msra.mxu0 0.0
    %194 = vmatpush.msra.mxu0 %v175
    %195 = vmatpush.msra.mxu0 %v174
    %196 = vmatpush.msra.mxu0 %v173
    %197 = vmatpush.msra.mxu0 %v172
    %198 = vmatmul.f32.gmra.mxu0 %v180
    %v199 = vpop.f32.mrf.mxu0
    %v200 = vadd.f32 0.0, %v199
    %201 = vdwg.mxu0
    %v202 = vadd.f32 %v170, %v200
    %v203 = vxor.u32 %v202, 2147483648
    %v204 = vmul.f32 %v203, 1.442695
    %v205 = vpow.pop %v204
    %v206 = vadd.f32 %v205, 1.0
    %v207 = vrcp.pop %v206
    %v208 = vmul.f32 %v206, %v207
    %v209 = vsub.f32 1.0, %v208
    %v210 = vmul.f32 %v207, %v209
    %v211 = vadd.f32 %v207, %v210
    %vm212 = vweird.f32 %v206
    %vm213 = vweird.f32 %v207
    %vm214 = vmor %vm212, %vm213
    %v215 = vsel %vm214, %v207, %v211
    %v216 = vand.u32 2147483647, %v206
    %vm217 = vcmp.eq.f32.partialorder %v216, 8.507059e+37
    %v218 = vand.u32 %v206, 2147483648
    %v219 = vor.u32 1.1754944e-38, %v218
    %v220 = vsel %vm217, %v219, %v215
    %v221 = vmul.f32 1.0, %v220
    %v222 = vtanh.pop %v202
    %v223 = vmul.f32 %v221, 0.0
    %225 = vrot.lane.b32.xlu0 %v222, 64
    %v226 = vpop.permute.xlu0 %225
    %v228 = vmul.f32 %v221, %v226
    %230 = vrot.lane.b32.xlu0 %v228, 32
    %v231 = vpop.permute.xlu0 %230
    %v233 = vadd.f32 %v223, %v231
    %v234 = vtanh.pop %v233
    %236 = vrot.lane.b32.xlu0 %v234, 64
    %v237 = vpop.permute.xlu0 %236
    %v239 = vmul.f32 %v221, %v237
    %vm240 = vcmp.eq.s32.totalorder %v177, 0
    %v241 = vperm.slane %v239, 0
    %v242 = vsel %vm240, %v241, 0.0
    %244 = vrot.lane.b32.xlu0 %v239, 32
    %v245 = vpop.permute.xlu0 %244
    %v246 = vsel %vm178, %v245, 0
    %248 = vmatpush.msra.mxu0 0.0
    %249 = vmatpush.msra.mxu0 0.0
    %250 = vmatpush.msra.mxu0 0.0
    %251 = vmatpush.msra.mxu0 0.0
    %252 = vmatpush.msra.mxu0 0.0
    %253 = vmatpush.msra.mxu0 0.0
    %254 = vmatpush.msra.mxu0 0.0
    %255 = vmatpush.msra.mxu0 0.0
    %256 = vmatpush.msra.mxu0 0.0
    %257 = vmatpush.msra.mxu0 0.0
    %258 = vmatpush.msra.mxu0 0.0
    %259 = vmatpush.msra.mxu0 0.0
    %260 = vmatpush.msra.mxu0 %v175
    %261 = vmatpush.msra.mxu0 %v174
    %262 = vmatpush.msra.mxu0 %v173
    %263 = vmatpush.msra.mxu0 %v172
    %264 = vmatmul.f32.gmra.mxu0 %v246
    %v265 = vpop.f32.mrf.mxu0
    %v266 = vadd.f32 0.0, %v265
    %267 = vdwg.mxu0
    %v269 = vrot.slane %v266, 7
    %v271 = vadd.f32 %v170, %v269
    %v272 = vxor.u32 %v271, 2147483648
    %v273 = vmul.f32 %v272, 1.442695
    %v274 = vpow.pop %v273
    %v275 = vadd.f32 %v274, 1.0
    %v276 = vrcp.pop %v275
    %v277 = vmul.f32 %v275, %v276
    %v278 = vsub.f32 1.0, %v277
    %v279 = vmul.f32 %v276, %v278
    %v280 = vadd.f32 %v276, %v279
    %vm281 = vweird.f32 %v275
    %vm282 = vweird.f32 %v276
    %vm283 = vmor %vm281, %vm282
    %v284 = vsel %vm283, %v276, %v280
    %v285 = vand.u32 2147483647, %v275
    %vm286 = vcmp.eq.f32.partialorder %v285, 8.507059e+37
    %v287 = vand.u32 %v275, 2147483648
    %v288 = vor.u32 1.1754944e-38, %v287
    %v289 = vsel %vm286, %v288, %v284
    %v290 = vmul.f32 1.0, %v289
    %v291 = vtanh.pop %v271
    %v293 = vrot.slane %v233, 7
    %v295 = vmul.f32 %v290, %v293
    %297 = vrot.lane.b32.xlu0 %v291, 64
    %v298 = vpop.permute.xlu0 %297
    %v300 = vmul.f32 %v290, %v298
    %302 = vrot.lane.b32.xlu0 %v300, 32
    %v303 = vpop.permute.xlu0 %302
    %v305 = vadd.f32 %v295, %v303
    %v306 = vtanh.pop %v305
    %308 = vrot.lane.b32.xlu0 %v306, 64
    %v309 = vpop.permute.xlu0 %308
    %v311 = vmul.f32 %v290, %v309
    %vm312 = vcmp.eq.s32.totalorder %v177, 1
    %v313 = vperm.slane %v311, 1
    %v314 = vsel %vm312, %v313, %v242
    %v316 = vrot.slane %v311, 1
    %317 = vrot.lane.b32.xlu0 %v316, 32
    %v318 = vpop.permute.xlu0 %317
    %v319 = vsel %vm178, %v318, 0
    %321 = vmatpush.msra.mxu0 0.0
    %322 = vmatpush.msra.mxu0 0.0
    %323 = vmatpush.msra.mxu0 0.0
    %324 = vmatpush.msra.mxu0 0.0
    %325 = vmatpush.msra.mxu0 0.0
    %326 = vmatpush.msra.mxu0 0.0
    %327 = vmatpush.msra.mxu0 0.0
    %328 = vmatpush.msra.mxu0 0.0
    %329 = vmatpush.msra.mxu0 0.0
    %330 = vmatpush.msra.mxu0 0.0
    %331 = vmatpush.msra.mxu0 0.0
    %332 = vmatpush.msra.mxu0 0.0
    %333 = vmatpush.msra.mxu0 %v175
    %334 = vmatpush.msra.mxu0 %v174
    %335 = vmatpush.msra.mxu0 %v173
    %336 = vmatpush.msra.mxu0 %v172
    %337 = vmatmul.f32.gmra.mxu0 %v319
    %v338 = vpop.f32.mrf.mxu0
    %v339 = vadd.f32 0.0, %v338
    %340 = vdwg.mxu0
    %v342 = vrot.slane %v339, 6
    %v344 = vadd.f32 %v170, %v342
    %v345 = vxor.u32 %v344, 2147483648
    %v346 = vmul.f32 %v345, 1.442695
    %v347 = vpow.pop %v346
    %v348 = vadd.f32 %v347, 1.0
    %v349 = vrcp.pop %v348
    %v350 = vmul.f32 %v348, %v349
    %v351 = vsub.f32 1.0, %v350
    %v352 = vmul.f32 %v349, %v351
    %v353 = vadd.f32 %v349, %v352
    %vm354 = vweird.f32 %v348
    %vm355 = vweird.f32 %v349
    %vm356 = vmor %vm354, %vm355
    %v357 = vsel %vm356, %v349, %v353
    %v358 = vand.u32 2147483647, %v348
    %vm359 = vcmp.eq.f32.partialorder %v358, 8.507059e+37
    %v360 = vand.u32 %v348, 2147483648
    %v361 = vor.u32 1.1754944e-38, %v360
    %v362 = vsel %vm359, %v361, %v357
    %v363 = vmul.f32 1.0, %v362
    %v364 = vtanh.pop %v344
    %v366 = vrot.slane %v305, 7
    %v368 = vmul.f32 %v363, %v366
    %370 = vrot.lane.b32.xlu0 %v364, 64
    %v371 = vpop.permute.xlu0 %370
    %v373 = vmul.f32 %v363, %v371
    %375 = vrot.lane.b32.xlu0 %v373, 32
    %v376 = vpop.permute.xlu0 %375
    %v378 = vadd.f32 %v368, %v376
    %v379 = vtanh.pop %v378
    %381 = vrot.lane.b32.xlu0 %v379, 64
    %v382 = vpop.permute.xlu0 %381
    %v384 = vmul.f32 %v363, %v382
    %vm385 = vcmp.eq.s32.totalorder %v177, 2
    %v386 = vperm.slane %v384, 2
    %v387 = vsel %vm385, %v386, %v314
    %v389 = vrot.slane %v384, 2
    %390 = vrot.lane.b32.xlu0 %v389, 32
    %v391 = vpop.permute.xlu0 %390
    %v392 = vsel %vm178, %v391, 0
    %394 = vmatpush.msra.mxu0 0.0
    %395 = vmatpush.msra.mxu0 0.0
    %396 = vmatpush.msra.mxu0 0.0
    %397 = vmatpush.msra.mxu0 0.0
    %398 = vmatpush.msra.mxu0 0.0
    %399 = vmatpush.msra.mxu0 0.0
    %400 = vmatpush.msra.mxu0 0.0
    %401 = vmatpush.msra.mxu0 0.0
    %402 = vmatpush.msra.mxu0 0.0
    %403 = vmatpush.msra.mxu0 0.0
    %404 = vmatpush.msra.mxu0 0.0
    %405 = vmatpush.msra.mxu0 0.0
    %406 = vmatpush.msra.mxu0 %v175
    %407 = vmatpush.msra.mxu0 %v174
    %408 = vmatpush.msra.mxu0 %v173
    %409 = vmatpush.msra.mxu0 %v172
    %410 = vmatmul.f32.gmra.mxu0 %v392
    %v411 = vpop.f32.mrf.mxu0
    %v412 = vadd.f32 0.0, %v411
    %413 = vdwg.mxu0
    %v415 = vrot.slane %v412, 5
    %v417 = vadd.f32 %v170, %v415
    %v418 = vxor.u32 %v417, 2147483648
    %v419 = vmul.f32 %v418, 1.442695
    %v420 = vpow.pop %v419
    %v421 = vadd.f32 %v420, 1.0
    %v422 = vrcp.pop %v421
    %v423 = vmul.f32 %v421, %v422
    %v424 = vsub.f32 1.0, %v423
    %v425 = vmul.f32 %v422, %v424
    %v426 = vadd.f32 %v422, %v425
    %vm427 = vweird.f32 %v421
    %vm428 = vweird.f32 %v422
    %vm429 = vmor %vm427, %vm428
    %v430 = vsel %vm429, %v422, %v426
    %v431 = vand.u32 2147483647, %v421
    %vm432 = vcmp.eq.f32.partialorder %v431, 8.507059e+37
    %v433 = vand.u32 %v421, 2147483648
    %v434 = vor.u32 1.1754944e-38, %v433
    %v435 = vsel %vm432, %v434, %v430
    %v436 = vmul.f32 1.0, %v435
    %v437 = vtanh.pop %v417
    %v439 = vrot.slane %v378, 7
    %v441 = vmul.f32 %v436, %v439
    %443 = vrot.lane.b32.xlu0 %v437, 64
    %v444 = vpop.permute.xlu0 %443
    %v446 = vmul.f32 %v436, %v444
    %448 = vrot.lane.b32.xlu0 %v446, 32
    %v449 = vpop.permute.xlu0 %448
    %v451 = vadd.f32 %v441, %v449
    %v452 = vtanh.pop %v451
    %454 = vrot.lane.b32.xlu0 %v452, 64
    %v455 = vpop.permute.xlu0 %454
    %v457 = vmul.f32 %v436, %v455
    %vm458 = vcmp.eq.s32.totalorder %v177, 3
    %v459 = vperm.slane %v457, 3
    %v460 = vsel %vm458, %v459, %v387
    %v462 = vrot.slane %v457, 3
    %463 = vrot.lane.b32.xlu0 %v462, 32
    %v464 = vpop.permute.xlu0 %463
    %v465 = vsel %vm178, %v464, 0
    %467 = vmatpush.msra.mxu0 0.0
    %468 = vmatpush.msra.mxu0 0.0
    %469 = vmatpush.msra.mxu0 0.0
    %470 = vmatpush.msra.mxu0 0.0
    %471 = vmatpush.msra.mxu0 0.0
    %472 = vmatpush.msra.mxu0 0.0
    %473 = vmatpush.msra.mxu0 0.0
    %474 = vmatpush.msra.mxu0 0.0
    %475 = vmatpush.msra.mxu0 0.0
    %476 = vmatpush.msra.mxu0 0.0
    %477 = vmatpush.msra.mxu0 0.0
    %478 = vmatpush.msra.mxu0 0.0
    %479 = vmatpush.msra.mxu0 %v175
    %480 = vmatpush.msra.mxu0 %v174
    %481 = vmatpush.msra.mxu0 %v173
    %482 = vmatpush.msra.mxu0 %v172
    %483 = vmatmul.f32.gmra.mxu0 %v465
    %v484 = vpop.f32.mrf.mxu0
    %v485 = vadd.f32 0.0, %v484
    %486 = vdwg.mxu0
    %v488 = vrot.slane %v485, 4
    %v490 = vadd.f32 %v170, %v488
    %v491 = vxor.u32 %v490, 2147483648
    %v492 = vmul.f32 %v491, 1.442695
    %v493 = vpow.pop %v492
    %v494 = vadd.f32 %v493, 1.0
    %v495 = vrcp.pop %v494
    %v496 = vmul.f32 %v494, %v495
    %v497 = vsub.f32 1.0, %v496
    %v498 = vmul.f32 %v495, %v497
    %v499 = vadd.f32 %v495, %v498
    %vm500 = vweird.f32 %v494
    %vm501 = vweird.f32 %v495
    %vm502 = vmor %vm500, %vm501
    %v503 = vsel %vm502, %v495, %v499
    %v504 = vand.u32 2147483647, %v494
    %vm505 = vcmp.eq.f32.partialorder %v504, 8.507059e+37
    %v506 = vand.u32 %v494, 2147483648
    %v507 = vor.u32 1.1754944e-38, %v506
    %v508 = vsel %vm505, %v507, %v503
    %v509 = vmul.f32 1.0, %v508
    %v510 = vtanh.pop %v490
    %v512 = vrot.slane %v451, 7
    %v514 = vmul.f32 %v509, %v512
    %516 = vrot.lane.b32.xlu0 %v510, 64
    %v517 = vpop.permute.xlu0 %516
    %v519 = vmul.f32 %v509, %v517
    %521 = vrot.lane.b32.xlu0 %v519, 32
    %v522 = vpop.permute.xlu0 %521
    %v524 = vadd.f32 %v514, %v522
    %v525 = vtanh.pop %v524
    %527 = vrot.lane.b32.xlu0 %v525, 64
    %v528 = vpop.permute.xlu0 %527
    %v530 = vmul.f32 %v509, %v528
    %vm531 = vcmp.eq.s32.totalorder %v177, 4
    %v532 = vperm.slane %v530, 4
    %v533 = vsel %vm531, %v532, %v460
    %v535 = vrot.slane %v530, 4
    %536 = vrot.lane.b32.xlu0 %v535, 32
    %v537 = vpop.permute.xlu0 %536
    %v538 = vsel %vm178, %v537, 0
    %540 = vmatpush.msra.mxu0 0.0
    %541 = vmatpush.msra.mxu0 0.0
    %542 = vmatpush.msra.mxu0 0.0
    %543 = vmatpush.msra.mxu0 0.0
    %544 = vmatpush.msra.mxu0 0.0
    %545 = vmatpush.msra.mxu0 0.0
    %546 = vmatpush.msra.mxu0 0.0
    %547 = vmatpush.msra.mxu0 0.0
    %548 = vmatpush.msra.mxu0 0.0
    %549 = vmatpush.msra.mxu0 0.0
    %550 = vmatpush.msra.mxu0 0.0
    %551 = vmatpush.msra.mxu0 0.0
    %552 = vmatpush.msra.mxu0 %v175
    %553 = vmatpush.msra.mxu0 %v174
    %554 = vmatpush.msra.mxu0 %v173
    %555 = vmatpush.msra.mxu0 %v172
    %556 = vmatmul.f32.gmra.mxu0 %v538
    %v557 = vpop.f32.mrf.mxu0
    %v558 = vadd.f32 0.0, %v557
    %559 = vdwg.mxu0
    %v561 = vrot.slane %v558, 3
    %v563 = vadd.f32 %v170, %v561
    %v564 = vxor.u32 %v563, 2147483648
    %v565 = vmul.f32 %v564, 1.442695
    %v566 = vpow.pop %v565
    %v567 = vadd.f32 %v566, 1.0
    %v568 = vrcp.pop %v567
    %v569 = vmul.f32 %v567, %v568
    %v570 = vsub.f32 1.0, %v569
    %v571 = vmul.f32 %v568, %v570
    %v572 = vadd.f32 %v568, %v571
    %vm573 = vweird.f32 %v567
    %vm574 = vweird.f32 %v568
    %vm575 = vmor %vm573, %vm574
    %v576 = vsel %vm575, %v568, %v572
    %v577 = vand.u32 2147483647, %v567
    %vm578 = vcmp.eq.f32.partialorder %v577, 8.507059e+37
    %v579 = vand.u32 %v567, 2147483648
    %v580 = vor.u32 1.1754944e-38, %v579
    %v581 = vsel %vm578, %v580, %v576
    %v582 = vmul.f32 1.0, %v581
    %v583 = vtanh.pop %v563
    %v585 = vrot.slane %v524, 7
    %v587 = vmul.f32 %v582, %v585
    %589 = vrot.lane.b32.xlu0 %v583, 64
    %v590 = vpop.permute.xlu0 %589
    %v592 = vmul.f32 %v582, %v590
    %594 = vrot.lane.b32.xlu0 %v592, 32
    %v595 = vpop.permute.xlu0 %594
    %v597 = vadd.f32 %v587, %v595
    %v598 = vtanh.pop %v597
    %600 = vrot.lane.b32.xlu0 %v598, 64
    %v601 = vpop.permute.xlu0 %600
    %v603 = vmul.f32 %v582, %v601
    %vm604 = vcmp.eq.s32.totalorder %v177, 5
    %v605 = vperm.slane %v603, 5
    %v606 = vsel %vm604, %v605, %v533
    %v608 = vrot.slane %v603, 5
    %609 = vrot.lane.b32.xlu0 %v608, 32
    %v610 = vpop.permute.xlu0 %609
    %v611 = vsel %vm178, %v610, 0
    %613 = vmatpush.msra.mxu0 0.0
    %614 = vmatpush.msra.mxu0 0.0
    %615 = vmatpush.msra.mxu0 0.0
    %616 = vmatpush.msra.mxu0 0.0
    %617 = vmatpush.msra.mxu0 0.0
    %618 = vmatpush.msra.mxu0 0.0
    %619 = vmatpush.msra.mxu0 0.0
    %620 = vmatpush.msra.mxu0 0.0
    %621 = vmatpush.msra.mxu0 0.0
    %622 = vmatpush.msra.mxu0 0.0
    %623 = vmatpush.msra.mxu0 0.0
    %624 = vmatpush.msra.mxu0 0.0
    %625 = vmatpush.msra.mxu0 %v175
    %626 = vmatpush.msra.mxu0 %v174
    %627 = vmatpush.msra.mxu0 %v173
    %628 = vmatpush.msra.mxu0 %v172
    %629 = vmatmul.f32.gmra.mxu0 %v611
    %v630 = vpop.f32.mrf.mxu0
    %v631 = vadd.f32 0.0, %v630
    %632 = vdwg.mxu0
    %v634 = vrot.slane %v631, 2
    %v636 = vadd.f32 %v170, %v634
    %v637 = vxor.u32 %v636, 2147483648
    %v638 = vmul.f32 %v637, 1.442695
    %v639 = vpow.pop %v638
    %v640 = vadd.f32 %v639, 1.0
    %v641 = vrcp.pop %v640
    %v642 = vmul.f32 %v640, %v641
    %v643 = vsub.f32 1.0, %v642
    %v644 = vmul.f32 %v641, %v643
    %v645 = vadd.f32 %v641, %v644
    %vm646 = vweird.f32 %v640
    %vm647 = vweird.f32 %v641
    %vm648 = vmor %vm646, %vm647
    %v649 = vsel %vm648, %v641, %v645
    %v650 = vand.u32 2147483647, %v640
    %vm651 = vcmp.eq.f32.partialorder %v650, 8.507059e+37
    %v652 = vand.u32 %v640, 2147483648
    %v653 = vor.u32 1.1754944e-38, %v652
    %v654 = vsel %vm651, %v653, %v649
    %v655 = vmul.f32 1.0, %v654
    %v656 = vtanh.pop %v636
    %v658 = vrot.slane %v597, 7
    %v660 = vmul.f32 %v655, %v658
    %662 = vrot.lane.b32.xlu0 %v656, 64
    %v663 = vpop.permute.xlu0 %662
    %v665 = vmul.f32 %v655, %v663
    %667 = vrot.lane.b32.xlu0 %v665, 32
    %v668 = vpop.permute.xlu0 %667
    %v670 = vadd.f32 %v660, %v668
    %v671 = vtanh.pop %v670
    %673 = vrot.lane.b32.xlu0 %v671, 64
    %v674 = vpop.permute.xlu0 %673
    %v676 = vmul.f32 %v655, %v674
    %vm677 = vcmp.eq.s32.totalorder %v177, 6
    %v678 = vperm.slane %v676, 6
    %v679 = vsel %vm677, %v678, %v606
    %v681 = vrot.slane %v676, 6
    %682 = vrot.lane.b32.xlu0 %v681, 32
    %v683 = vpop.permute.xlu0 %682
    %v684 = vsel %vm178, %v683, 0
    %686 = vmatpush.msra.mxu0 0.0
    %687 = vmatpush.msra.mxu0 0.0
    %688 = vmatpush.msra.mxu0 0.0
    %689 = vmatpush.msra.mxu0 0.0
    %690 = vmatpush.msra.mxu0 0.0
    %691 = vmatpush.msra.mxu0 0.0
    %692 = vmatpush.msra.mxu0 0.0
    %693 = vmatpush.msra.mxu0 0.0
    %694 = vmatpush.msra.mxu0 0.0
    %695 = vmatpush.msra.mxu0 0.0
    %696 = vmatpush.msra.mxu0 0.0
    %697 = vmatpush.msra.mxu0 0.0
    %698 = vmatpush.msra.mxu0 %v175
    %699 = vmatpush.msra.mxu0 %v174
    %700 = vmatpush.msra.mxu0 %v173
    %701 = vmatpush.msra.mxu0 %v172
    %702 = vmatmul.f32.gmra.mxu0 %v684
    %v703 = vpop.f32.mrf.mxu0
    %v704 = vadd.f32 0.0, %v703
    %705 = vdwg.mxu0
    %v707 = vrot.slane %v704, 1
    %v709 = vadd.f32 %v170, %v707
    %v710 = vxor.u32 %v709, 2147483648
    %v711 = vmul.f32 %v710, 1.442695
    %v712 = vpow.pop %v711
    %v713 = vadd.f32 %v712, 1.0
    %v714 = vrcp.pop %v713
    %v715 = vmul.f32 %v713, %v714
    %v716 = vsub.f32 1.0, %v715
    %v717 = vmul.f32 %v714, %v716
    %v718 = vadd.f32 %v714, %v717
    %vm719 = vweird.f32 %v713
    %vm720 = vweird.f32 %v714
    %vm721 = vmor %vm719, %vm720
    %v722 = vsel %vm721, %v714, %v718
    %v723 = vand.u32 2147483647, %v713
    %vm724 = vcmp.eq.f32.partialorder %v723, 8.507059e+37
    %v725 = vand.u32 %v713, 2147483648
    %v726 = vor.u32 1.1754944e-38, %v725
    %v727 = vsel %vm724, %v726, %v722
    %v728 = vmul.f32 1.0, %v727
    %v729 = vtanh.pop %v709
    %v731 = vrot.slane %v670, 7
    %v733 = vmul.f32 %v728, %v731
    %735 = vrot.lane.b32.xlu0 %v729, 64
    %v736 = vpop.permute.xlu0 %735
    %v738 = vmul.f32 %v728, %v736
    %740 = vrot.lane.b32.xlu0 %v738, 32
    %v741 = vpop.permute.xlu0 %740
    %v743 = vadd.f32 %v733, %v741
    %v744 = vtanh.pop %v743
    %746 = vrot.lane.b32.xlu0 %v744, 64
    %v747 = vpop.permute.xlu0 %746
    %v749 = vmul.f32 %v728, %v747
    %vm750 = vcmp.eq.s32.totalorder %v177, 7
    %v751 = vperm.slane %v749, 7
    %v752 = vsel %vm750, %v751, %v679
    %v753 = vld [vmem:[#allocation8] sm:$0xff]
    %v754 = vld [vmem:[#allocation8 + $0x8] sm:$0xff]
    %v755 = vld [vmem:[#allocation8 + $0x10] sm:$0xff]
    %v756 = vld [vmem:[#allocation8 + $0x18] sm:$0xff]
    %v757 = vld [vmem:[%s5] sm:$0x1]
    %v759 = vperm.slane %v757, 0
    %762 = vrot.lane.b32.xlu0 %v752, 32
    %v763 = vpop.permute.xlu0 %762
    %v764 = vsel %vm178, %v763, 0
    %766 = vmatpush.msra.mxu0 0.0
    %767 = vmatpush.msra.mxu0 0.0
    %768 = vmatpush.msra.mxu0 0.0
    %769 = vmatpush.msra.mxu0 0.0
    %770 = vmatpush.msra.mxu0 0.0
    %771 = vmatpush.msra.mxu0 0.0
    %772 = vmatpush.msra.mxu0 0.0
    %773 = vmatpush.msra.mxu0 0.0
    %774 = vmatpush.msra.mxu0 0.0
    %775 = vmatpush.msra.mxu0 0.0
    %776 = vmatpush.msra.mxu0 0.0
    %777 = vmatpush.msra.mxu0 0.0
    %778 = vmatpush.msra.mxu0 %v756
    %779 = vmatpush.msra.mxu0 %v755
    %780 = vmatpush.msra.mxu0 %v754
    %781 = vmatpush.msra.mxu0 %v753
    %782 = vmatmul.f32.gmra.mxu0 %v764
    %v783 = vpop.f32.mrf.mxu0
    %v784 = vadd.f32 %v759, %v783
    %785 = vdwg.mxu0
    %v786 = vmax.f32 %v784, 0.0
    %v787 = vld [vmem:[#allocation10] sm:$0xff]
    %v788 = vld [vmem:[#allocation10 + $0x8] sm:$0xff]
    %v789 = vld [vmem:[#allocation10 + $0x10] sm:$0xff]
    %v790 = vld [vmem:[#allocation10 + $0x18] sm:$0xff]
    %v791 = vld [vmem:[%s7] sm:$0x1]
    %v793 = vperm.slane %v791, 0
    %v796 = vsel %vm178, %v786, 0
    %798 = vmatpush.msra.mxu0 0.0
    %799 = vmatpush.msra.mxu0 0.0
    %800 = vmatpush.msra.mxu0 0.0
    %801 = vmatpush.msra.mxu0 0.0
    %802 = vmatpush.msra.mxu0 0.0
    %803 = vmatpush.msra.mxu0 0.0
    %804 = vmatpush.msra.mxu0 0.0
    %805 = vmatpush.msra.mxu0 0.0
    %806 = vmatpush.msra.mxu0 0.0
    %807 = vmatpush.msra.mxu0 0.0
    %808 = vmatpush.msra.mxu0 0.0
    %809 = vmatpush.msra.mxu0 0.0
    %810 = vmatpush.msra.mxu0 %v790
    %811 = vmatpush.msra.mxu0 %v789
    %812 = vmatpush.msra.mxu0 %v788
    %813 = vmatpush.msra.mxu0 %v787
    %814 = vmatmul.f32.gmra.mxu0 %v796
    %v815 = vpop.f32.mrf.mxu0
    %v816 = vadd.f32 %v793, %v815
    %817 = vdwg.mxu0
    %v818 = vmax.f32 %v816, 0.0
    %v819 = vld [vmem:[#allocation11] sm:$0xff]
    %v820 = vld [vmem:[#allocation11 + $0x8] sm:$0xff]
    %v821 = vld [vmem:[#allocation11 + $0x10] sm:$0xff]
    %v822 = vld [vmem:[#allocation11 + $0x18] sm:$0xff]
    %v823 = vld [vmem:[%s9] sm:$0x1]
    %v825 = vperm.slane %v823, 0
    %v828 = vsel %vm178, %v818, 0
    %830 = vmatpush.msra.mxu0 0.0
    %831 = vmatpush.msra.mxu0 0.0
    %832 = vmatpush.msra.mxu0 0.0
    %833 = vmatpush.msra.mxu0 0.0
    %834 = vmatpush.msra.mxu0 0.0
    %835 = vmatpush.msra.mxu0 0.0
    %836 = vmatpush.msra.mxu0 0.0
    %837 = vmatpush.msra.mxu0 0.0
    %838 = vmatpush.msra.mxu0 0.0
    %839 = vmatpush.msra.mxu0 0.0
    %840 = vmatpush.msra.mxu0 0.0
    %841 = vmatpush.msra.mxu0 0.0
    %842 = vmatpush.msra.mxu0 %v822
    %843 = vmatpush.msra.mxu0 %v821
    %844 = vmatpush.msra.mxu0 %v820
    %845 = vmatpush.msra.mxu0 %v819
    %846 = vmatmul.f32.gmra.mxu0 %v828
    %v847 = vpop.f32.mrf.mxu0
    %v848 = vadd.f32 %v825, %v847
    %849 = vdwg.mxu0
    %850 = vst [vmem:[#allocation13] sm:$0xff] %v848
    // Predicated region
    $region66: #{tpu_custom_call.1} parent=1 // pred_check
      _
    $region67: #{tpu_custom_call.1} parent=1 // pred_check_branch
      %852 = sbr.rel (0) target = $region69
    $region68: #{tpu_custom_call.1} parent=1 // pred_region
      %854 = vsyncadd [#allocation4], 0
      %s856 = sshll.u32 [#allocation13], 4
      %s857 = int_to_ptr.vmem [resolvable:$true] %s856
      %s858 = sshll.u32 %s10, 4
      %s859 = int_to_ptr.hbm [resolvable:$true] %s858
      %861 = dma.vmem_to_hbm [thread:$0]  %s857, 128, %s859, [#allocation4]
    $region69: #{tpu_custom_call.1} parent=1 // pred_fallthru
      _
    // Predicated region
    $region70: #{tpu_custom_call.1} parent=1 // pred_check
      _
    $region71: #{tpu_custom_call.1} parent=1 // pred_check_branch
      %863 = sbr.rel (0) target = $region73
    $region72: #{tpu_custom_call.1} parent=1 // pred_region
      %865 = dma.done [#allocation4], 128
    $region73: #{tpu_custom_call.1} parent=1 // pred_fallthru
      _
    %866 = vsyncpa [#allocation3], 1
    %867 = vsyncpa [#allocation6], 1
    %868 = vsyncpa [#allocation9], 1
    %869 = vsyncpa [#allocation12], 1
    %870 = vsyncpa [#allocation4], 1

</llo_original>
